<compile_context>
chip_gen: v6e
topology: v6e:2x2x1
jax: 0.10.0
libtpu: 0.0.40
codegen_flags: <defaults>
</compile_context>

<pallas_src>
import functools

import jax
import jax.numpy as jnp
from jax.experimental import pallas as pl
from jax.experimental.pallas import tpu as pltpu


# ---------------------------------------------------------------------------
# Fused kernel: context concat + rolling-buffer update + feature projection.
#   feats   = concat([ctx, x], 0) @ W + b      (cat never materialized)
#   new_ctx = concat([ctx, x], 0)[-C:]         (built straight from the inputs)
# ---------------------------------------------------------------------------
def _fused_ctx_proj_kernel(ctx_ref, x_ref, w_ref, b_ref, feats_ref, newctx_ref):
    C = ctx_ref.shape[0]
    T = x_ref.shape[0]

    w = w_ref[...]                               # bf16 weights -> MXU fast path
    b = b_ref[...].astype(jnp.float32)           # (1, H) bias, added in f32

    # Two MXU dots with f32 accumulation; no (C+T, F) concat tensor needed.
    feats_ref[0:C, :] = (
        jnp.dot(ctx_ref[...].astype(w.dtype), w, preferred_element_type=jnp.float32)
        + b
    ).astype(feats_ref.dtype)
    feats_ref[C:C + T, :] = (
        jnp.dot(x_ref[...].astype(w.dtype), w, preferred_element_type=jnp.float32)
        + b
    ).astype(feats_ref.dtype)

    # Rolling context buffer, computed directly from the input refs
    # (matches torch: ctx_ = cat([ctx, x], 0)[-C:], which always holds for T > 0).
    if T >= C:
        newctx_ref[...] = x_ref[T - C:T, :]
    else:
        newctx_ref[0:C - T, :] = ctx_ref[T:C, :]
        newctx_ref[C - T:C, :] = x_ref[...]


@functools.partial(jax.jit, donate_argnums=(0,))
def _fused_forward(ctx_buf, x, w, b):
    C, F = ctx_buf.shape
    T = x.shape[0]
    H = w.shape[1]
    vmem = pl.BlockSpec(memory_space=pltpu.MemorySpace.VMEM)
    return pl.pallas_call(
        _fused_ctx_proj_kernel,
        out_shape=(
            jax.ShapeDtypeStruct((C + T, H), jnp.float32),   # feats
            jax.ShapeDtypeStruct((C, F), ctx_buf.dtype),     # new context buffer
        ),
        in_specs=[vmem, vmem, vmem, vmem],
        out_specs=(vmem, vmem),
        # Rolling buffer is updated in place: ctx input buffer is reused for new_ctx.
        input_output_aliases={0: 1},
    )(ctx_buf, x, w, b)


# ---------------------------------------------------------------------------
# Projection-only path (context_buffer == 0).
# ---------------------------------------------------------------------------
def _proj_kernel(x_ref, w_ref, b_ref, feats_ref):
    w = w_ref[...]
    y = jnp.dot(x_ref[...].astype(w.dtype), w, preferred_element_type=jnp.float32)
    feats_ref[...] = (y + b_ref[...].astype(jnp.float32)).astype(feats_ref.dtype)


@jax.jit
def _project_forward(x, w, b):
    T = x.shape[0]
    H = w.shape[1]
    vmem = pl.BlockSpec(memory_space=pltpu.MemorySpace.VMEM)
    return pl.pallas_call(
        _proj_kernel,
        out_shape=jax.ShapeDtypeStruct((T, H), jnp.float32),
        in_specs=[vmem, vmem, vmem],
        out_specs=vmem,
    )(x, w, b)


# ---------------------------------------------------------------------------
# Functional MultiStreamer wrapper (state carried explicitly).
# ---------------------------------------------------------------------------
class MultiStreamerPallas:
    def __init__(self, context_buffer, feat_dim, hidden_dim):
        self.context_buffer = context_buffer
        self.feat_dim = feat_dim
        kw, kb = jax.random.split(jax.random.PRNGKey(42))
        # TODO(synk): the real model.feature_extractor is checkpoint-defined and
        #             stateful; a deterministic bf16 linear projection stands in
        #             for its hot path on the MXU.
        self.ft_w = (
            jax.random.normal(kw, (feat_dim, hidden_dim), jnp.float32) * 0.1
        ).astype(jnp.bfloat16)
        self.ft_b = jax.random.normal(kb, (1, hidden_dim), jnp.float32) * 0.01
        self.context_buffer_ = None  # (C, F) f32 or None

    def clear_cache(self):
        self.context_buffer_ = None

    def forward(self, x):
        if x is None:
            # TODO(synk): torch streamers still run on x=None (emit buffered text /
            #             silence); RNNT beam search & vocoder are untranslatable.
            return {}
        x = jnp.asarray(x, jnp.float32)
        if self.context_buffer > 0:
            if self.context_buffer_ is None:
                self.context_buffer_ = jnp.zeros(
                    (self.context_buffer, x.shape[1]), jnp.float32
                )
            feats, self.context_buffer_ = _fused_forward(
                self.context_buffer_, x, self.ft_w, self.ft_b
            )
        else:
            feats = _project_forward(x, self.ft_w, self.ft_b)
        # TODO(synk): RNNT beam search (decoder.infer), token->text decoding and
        #             HiFi vocoder synthesis (data-dependent hypotheses / Python
        #             objects) have no Pallas equivalent.
        return {"features": feats, "context_buffer": self.context_buffer_}


if __name__ == "__main__":
    key = jax.random.PRNGKey(0)
    # Small but lane-dense shapes: F and H are multiples of 128.
    T, F, C, H = 16, 128, 8, 256
    k1, k2 = jax.random.split(key)
    x1 = jax.random.normal(k1, (T, F), jnp.float32)
    x2 = jax.random.normal(k2, (T, F), jnp.float32)

    streamer = MultiStreamerPallas(context_buffer=C, feat_dim=F, hidden_dim=H)
    out1 = streamer.forward(x1)          # first chunk (zero context)
    out2 = streamer.forward(x2)          # second chunk (rolled context)
    feats1 = jax.block_until_ready(out1["features"])
    feats2 = jax.block_until_ready(out2["features"])
    ctx2 = jax.block_until_ready(out2["context_buffer"])

    # ---- pure-JAX reference (same bf16 rounding of the MXU operands) ----
    w_f32 = streamer.ft_w.astype(jnp.float32)
    b_f32 = streamer.ft_b

    def ref_step(ctx, x):
        cat = jnp.concatenate([ctx, x], axis=0)
        feats = cat.astype(jnp.bfloat16).astype(jnp.float32) @ w_f32 + b_f32
        return feats, cat[-C:]

    ctx0 = jnp.zeros((C, F), jnp.float32)
    feats1_r, ctx1_r = ref_step(ctx0, x1)
    feats2_r, ctx2_r = ref_step(ctx1_r, x2)

    assert feats1.shape == (C + T, H)
    assert feats2.shape == (C + T, H)
    assert ctx2.shape == (C, F)
    assert jnp.allclose(feats1, feats1_r, atol=5e-3, rtol=5e-3)
    assert jnp.allclose(feats2, feats2_r, atol=5e-3, rtol=5e-3)
    assert jnp.allclose(ctx2, ctx2_r)

    print("KERNEL_OK")
</pallas_src>

<mosaic_0001>
module attributes {stable_mosaic.version = 11 : i64} {
  func.func @_fused_ctx_proj_kernel(%arg0: memref<8x128xf32, #tpu.memory_space<vmem>>, %arg1: memref<16x128xf32, #tpu.memory_space<vmem>>, %arg2: memref<128x256xbf16, #tpu.memory_space<vmem>>, %arg3: memref<1x256xf32, #tpu.memory_space<vmem>>, %arg4: memref<24x256xf32, #tpu.memory_space<vmem>>, %arg5: memref<8x128xf32, #tpu.memory_space<vmem>>) attributes {dimension_semantics = [], scalar_prefetch = 0 : i64, scratch_operands = 0 : i64, tpu.core_type = #tpu.core_type<tc>} {
    %c0 = arith.constant 0 : index
    %c0_0 = arith.constant 0 : index
    %0 = vector.load %arg2[%c0, %c0_0] : memref<128x256xbf16, #tpu.memory_space<vmem>>, vector<128x256xbf16>
    %c0_1 = arith.constant 0 : index
    %c0_2 = arith.constant 0 : index
    %1 = vector.load %arg3[%c0_1, %c0_2] : memref<1x256xf32, #tpu.memory_space<vmem>>, vector<1x256xf32>
    %c0_3 = arith.constant 0 : index
    %c0_4 = arith.constant 0 : index
    %2 = vector.load %arg0[%c0_3, %c0_4] : memref<8x128xf32, #tpu.memory_space<vmem>>, vector<8x128xf32>
    %3 = arith.truncf %2 : vector<8x128xf32> to vector<8x128xbf16>
    %cst = arith.constant dense<0.000000e+00> : vector<8x256xf32>
    %4 = tpu.matmul %3, %0, %cst {dimension_numbers = #tpu.dot_dimension_numbers<[1], [0], [0], [1], [0, 0, 1, 1], [], []>} : vector<8x128xbf16>, vector<128x256xbf16>, vector<8x256xf32> -> vector<8x256xf32>
    %5 = vector.broadcast %1 : vector<1x256xf32> to vector<8x256xf32>
    %6 = arith.addf %4, %5 : vector<8x256xf32>
    %c0_5 = arith.constant 0 : index
    %c0_6 = arith.constant 0 : index
    %7 = vector.load %arg4[%c0_5, %c0_6] : memref<24x256xf32, #tpu.memory_space<vmem>>, vector<8x256xf32>
    tpu.vector_store %arg4[%c0_5, %c0_6], %6 {strides = array<i32>} : memref<24x256xf32, #tpu.memory_space<vmem>>, vector<8x256xf32>,
    %c0_7 = arith.constant 0 : index
    %c0_8 = arith.constant 0 : index
    %8 = vector.load %arg1[%c0_7, %c0_8] : memref<16x128xf32, #tpu.memory_space<vmem>>, vector<16x128xf32>
    %9 = arith.truncf %8 : vector<16x128xf32> to vector<16x128xbf16>
    %cst_9 = arith.constant dense<0.000000e+00> : vector<16x256xf32>
    %10 = tpu.matmul %9, %0, %cst_9 {dimension_numbers = #tpu.dot_dimension_numbers<[1], [0], [0], [1], [0, 0, 1, 1], [], []>} : vector<16x128xbf16>, vector<128x256xbf16>, vector<16x256xf32> -> vector<16x256xf32>
    %11 = vector.broadcast %1 : vector<1x256xf32> to vector<16x256xf32>
    %12 = arith.addf %10, %11 : vector<16x256xf32>
    %c8 = arith.constant 8 : index
    %c0_10 = arith.constant 0 : index
    %13 = vector.load %arg4[%c8, %c0_10] : memref<24x256xf32, #tpu.memory_space<vmem>>, vector<16x256xf32>
    tpu.vector_store %arg4[%c8, %c0_10], %12 {strides = array<i32>} : memref<24x256xf32, #tpu.memory_space<vmem>>, vector<16x256xf32>,
    %c8_11 = arith.constant 8 : index
    %c0_12 = arith.constant 0 : index
    %14 = vector.load %arg1[%c8_11, %c0_12] : memref<16x128xf32, #tpu.memory_space<vmem>>, vector<8x128xf32>
    %c0_13 = arith.constant 0 : index
    %c0_14 = arith.constant 0 : index
    %15 = vector.load %arg5[%c0_13, %c0_14] : memref<8x128xf32, #tpu.memory_space<vmem>>, vector<8x128xf32>
    tpu.vector_store %arg5[%c0_13, %c0_14], %14 {strides = array<i32>} : memref<8x128xf32, #tpu.memory_space<vmem>>, vector<8x128xf32>,
    return
  }
}

</mosaic_0001>

<llo_original>
// kernel: _fused_forward.1
$region0: #{_fused_forward.1}
  #allocation0 [shape = 'u32[]', space=smem, size = 0x4, offset = 0x4, fixed_abs, tag = 'smem constant byte address 0x4 - core index']
  #allocation1 [shape = 'u32[144,128]{1,0:T(1,128)}', space=vmem, size = 0x12000, scoped, tag = 'internal scratch']
  %s0 = inlined_call_operand.hbm [shape: f32[8,128], index: 0, kind: input, shape index: {}, may-alias: {0,5}]
  %s1 = inlined_call_operand.hbm [shape: f32[16,128], index: 1, kind: input, shape index: {}]
  %s2 = inlined_call_operand.hbm [shape: bf16[128,256], index: 2, kind: input, shape index: {}]
  %s3 = inlined_call_operand.vmem [shape: f32[1,256], index: 3, kind: input, shape index: {}]
  %s4 = inlined_call_operand.hbm [shape: f32[24,256], index: 4, kind: output, shape index: {0}]
  %s5 = inlined_call_operand.hbm [shape: f32[8,128], index: 5, kind: output, shape index: {1}, may-alias: {0,5}]
  %6 = xla_tuple %s4, %s5
  %s7 = sld [smem:[#allocation0]]
  $region46: #{_fused_forward.1} parent=0
    _
  %s9 = ssub.s32 1, %s7
  %s10 = scalar_select 0, %s9, %s7
  $region1: #{_fused_forward.1} parent=0
    #allocation2 [shape = 'u8[4096]{0}', space=vmem, size = 0x1000, scoped, tag = 'input window, operand 0, single buffered']
    #allocation3 [shape = 's32[1]{0}', space=sflag, size = 0x4, scoped, tag = 'scoped memory for _fused_forward.1']
    #allocation4 [shape = 's32[1]{0}', space=sflag, size = 0x4, scoped, tag = 'scoped memory for _fused_forward.1']
    #allocation5 [shape = 'u8[8192]{0}', space=vmem, size = 0x2000, scoped, tag = 'input window, operand 1, single buffered']
    #allocation6 [shape = 's32[1]{0}', space=sflag, size = 0x4, scoped, tag = 'scoped memory for _fused_forward.1']
    #allocation7 [shape = 'u8[65536]{0}', space=vmem, size = 0x10000, scoped, tag = 'input window, operand 2, single buffered']
    #allocation8 [shape = 'u8[24576]{0}', space=vmem, size = 0x6000, scoped, tag = 'output window, operand 0, single buffered']
    #allocation9 [shape = 'u8[4096]{0}', space=vmem, size = 0x1000, scoped, tag = 'output window, operand 1, single buffered']
    #allocation10 [shape = 's32[1]{0}', space=sflag, size = 0x4, scoped, tag = 'scoped memory for _fused_forward.1']
    %11 = vsyncpa [#allocation3], 0
    %12 = vsyncpa [#allocation6], 0
    %13 = vsyncpa [#allocation4], 0
    %14 = vsyncpa [#allocation10], 0
    // Predicated region
    $region2: #{_fused_forward.1} parent=1 // pred_check
      _
    $region3: #{_fused_forward.1} parent=1 // pred_check_branch
      %16 = sbr.rel (0) target = $region5
    $region4: #{_fused_forward.1} parent=1 // pred_region
      %s18 = ssub.s32 128, 128
      %19 = vsyncadd [#allocation3], %s18
      %s21 = sshll.u32 [#allocation2], 4
      %s22 = int_to_ptr.vmem [resolvable:$true] %s21
      %24 = dma.hbm_to_vmem [thread:$0]  %s0, 128, %s22, [#allocation3]
    $region5: #{_fused_forward.1} parent=1 // pred_fallthru
      _
    // Predicated region
    $region6: #{_fused_forward.1} parent=1 // pred_check
      _
    $region7: #{_fused_forward.1} parent=1 // pred_check_branch
      %26 = sbr.rel (0) target = $region9
    $region8: #{_fused_forward.1} parent=1 // pred_region
      %s28 = ssub.s32 256, 256
      %29 = vsyncadd [#allocation6], %s28
      %s30 = sshll.u32 [#allocation5], 4
      %s31 = int_to_ptr.vmem [resolvable:$true] %s30
      %36 = dma.hbm_to_vmem [thread:$0]  %s1, 256, %s31, [#allocation6], 128, 128, 8
    $region9: #{_fused_forward.1} parent=1 // pred_fallthru
      _
    // Predicated region
    $region10: #{_fused_forward.1} parent=1 // pred_check
      _
    $region11: #{_fused_forward.1} parent=1 // pred_check_branch
      %38 = sbr.rel (0) target = $region13
    $region12: #{_fused_forward.1} parent=1 // pred_region
      %s40 = ssub.s32 2048, 2048
      %41 = vsyncadd [#allocation6], %s40
      %s42 = sshll.u32 [#allocation7], 4
      %s43 = int_to_ptr.vmem [resolvable:$true] %s42
      %48 = dma.hbm_to_vmem [thread:$0]  %s2, 2048, %s43, [#allocation6], 128, 128, 8
    $region13: #{_fused_forward.1} parent=1 // pred_fallthru
      _
    // Predicated region
    $region14: #{_fused_forward.1} parent=1 // pred_check
      _
    $region15: #{_fused_forward.1} parent=1 // pred_check_branch
      %50 = sbr.rel (0) target = $region17
    $region16: #{_fused_forward.1} parent=1 // pred_region
      _
    $region17: #{_fused_forward.1} parent=1 // pred_fallthru
      _
    // Predicated region
    $region18: #{_fused_forward.1} parent=1 // pred_check
      _
    $region19: #{_fused_forward.1} parent=1 // pred_check_branch
      %52 = sbr.rel (0) target = $region21
    $region20: #{_fused_forward.1} parent=1 // pred_region
      %53 = dma.done [#allocation3], 128
    $region21: #{_fused_forward.1} parent=1 // pred_fallthru
      _
    // Predicated region
    $region22: #{_fused_forward.1} parent=1 // pred_check
      _
    $region23: #{_fused_forward.1} parent=1 // pred_check_branch
      %55 = sbr.rel (0) target = $region25
    $region24: #{_fused_forward.1} parent=1 // pred_region
      %56 = dma.done [#allocation6], 256
    $region25: #{_fused_forward.1} parent=1 // pred_fallthru
      _
    // Predicated region
    $region26: #{_fused_forward.1} parent=1 // pred_check
      _
    $region27: #{_fused_forward.1} parent=1 // pred_check_branch
      %58 = sbr.rel (0) target = $region29
    $region28: #{_fused_forward.1} parent=1 // pred_region
      %59 = dma.done [#allocation6], 2048
    $region29: #{_fused_forward.1} parent=1 // pred_fallthru
      _
    %v61 = vld [vmem:[#allocation7] sm:$0xff]
    %v62 = vld [vmem:[#allocation7 + $0x8] sm:$0xff]
    %v63 = vld [vmem:[#allocation7 + $0x10] sm:$0xff]
    %v64 = vld [vmem:[#allocation7 + $0x18] sm:$0xff]
    %v65 = vld [vmem:[#allocation7 + $0x20] sm:$0xff]
    %v66 = vld [vmem:[#allocation7 + $0x28] sm:$0xff]
    %v67 = vld [vmem:[#allocation7 + $0x30] sm:$0xff]
    %v68 = vld [vmem:[#allocation7 + $0x38] sm:$0xff]
    %v69 = vld [vmem:[#allocation7 + $0x40] sm:$0xff]
    %v70 = vld [vmem:[#allocation7 + $0x48] sm:$0xff]
    %v71 = vld [vmem:[#allocation7 + $0x50] sm:$0xff]
    %v72 = vld [vmem:[#allocation7 + $0x58] sm:$0xff]
    %v73 = vld [vmem:[#allocation7 + $0x60] sm:$0xff]
    %v74 = vld [vmem:[#allocation7 + $0x68] sm:$0xff]
    %v75 = vld [vmem:[#allocation7 + $0x70] sm:$0xff]
    %v76 = vld [vmem:[#allocation7 + $0x78] sm:$0xff]
    %v77 = vld [vmem:[%s3] sm:$0x3]
    %v78 = vld [vmem:[#allocation2] sm:$0xff]
    %v79 = vpack.c.bf16 %v78, %v78
    %v81 = vlaneseq
    %v82 = vshrl.u32 %v81, 7
    %v83 = vsub.s32 0, %v82
    %v84 = vrot.slane %v77, %v83
    %v85 = vlaneseq
    %v86 = vshrl.u32 %v85, 7
    %v87 = vsub.s32 1, %v86
    %v88 = vrot.slane %v77, %v87
    %v107 = vunpack.c.l.b16 %v61
    %v108 = vunpack.c.h.b16 %v61
    %v109 = vunpack.c.l.b16 %v62
    %v110 = vunpack.c.h.b16 %v62
    %v111 = vunpack.c.l.b16 %v63
    %v112 = vunpack.c.h.b16 %v63
    %v113 = vunpack.c.l.b16 %v64
    %v114 = vunpack.c.h.b16 %v64
    %v115 = vunpack.c.l.b16 %v65
    %v116 = vunpack.c.h.b16 %v65
    %v117 = vunpack.c.l.b16 %v66
    %v118 = vunpack.c.h.b16 %v66
    %v119 = vunpack.c.l.b16 %v67
    %v120 = vunpack.c.h.b16 %v67
    %v121 = vunpack.c.l.b16 %v68
    %v122 = vunpack.c.h.b16 %v68
    %v123 = vunpack.c.l.b16 %v69
    %v124 = vunpack.c.h.b16 %v69
    %v125 = vunpack.c.l.b16 %v70
    %v126 = vunpack.c.h.b16 %v70
    %v127 = vunpack.c.l.b16 %v71
    %v128 = vunpack.c.h.b16 %v71
    %v129 = vunpack.c.l.b16 %v72
    %v130 = vunpack.c.h.b16 %v72
    %v131 = vunpack.c.l.b16 %v73
    %v132 = vunpack.c.h.b16 %v73
    %v133 = vunpack.c.l.b16 %v74
    %v134 = vunpack.c.h.b16 %v74
    %v135 = vunpack.c.l.b16 %v75
    %v136 = vunpack.c.h.b16 %v75
    %v137 = vunpack.c.l.b16 %v76
    %v138 = vunpack.c.h.b16 %v76
    %v139 = vpack.c.b16 %v109, %v107
    %v140 = vpack.c.b16 %v110, %v108
    %v141 = vpack.c.b16 %v113, %v111
    %v142 = vpack.c.b16 %v114, %v112
    %v143 = vpack.c.b16 %v117, %v115
    %v144 = vpack.c.b16 %v118, %v116
    %v145 = vpack.c.b16 %v121, %v119
    %v146 = vpack.c.b16 %v122, %v120
    %v147 = vpack.c.b16 %v125, %v123
    %v148 = vpack.c.b16 %v126, %v124
    %v149 = vpack.c.b16 %v129, %v127
    %v150 = vpack.c.b16 %v130, %v128
    %v151 = vpack.c.b16 %v133, %v131
    %v152 = vpack.c.b16 %v134, %v132
    %v153 = vpack.c.b16 %v137, %v135
    %v154 = vpack.c.b16 %v138, %v136
    %171 = vmatprep.subr.bf16.mxu0 %v154
    %172 = vmatpush1.bf16.msra.mxu0 %v153
    %173 = vmatprep.subr.bf16.mxu0 %v152
    %174 = vmatpush1.bf16.msra.mxu0 %v151
    %175 = vmatprep.subr.bf16.mxu0 %v150
    %176 = vmatpush1.bf16.msra.mxu0 %v149
    %177 = vmatprep.subr.bf16.mxu0 %v148
    %178 = vmatpush1.bf16.msra.mxu0 %v147
    %179 = vmatprep.subr.bf16.mxu0 %v146
    %180 = vmatpush1.bf16.msra.mxu0 %v145
    %181 = vmatprep.subr.bf16.mxu0 %v144
    %182 = vmatpush1.bf16.msra.mxu0 %v143
    %183 = vmatprep.subr.bf16.mxu0 %v142
    %184 = vmatpush1.bf16.msra.mxu0 %v141
    %185 = vmatprep.subr.bf16.mxu0 %v140
    %186 = vmatpush1.bf16.msra.mxu0 %v139
    %187 = vmatprep.subr.bf16.mxu0 0
    %188 = vmatpush2.bf16.msra.mxu0 0
    %189 = vmatprep.subr.bf16.mxu0 0
    %190 = vmatpush2.bf16.msra.mxu0 0
    %191 = vmatprep.subr.bf16.mxu0 0
    %192 = vmatpush2.bf16.msra.mxu0 0
    %193 = vmatprep.subr.bf16.mxu0 0
    %194 = vmatpush2.bf16.msra.mxu0 0
    %195 = vmatprep.subr.bf16.mxu0 0
    %196 = vmatpush2.bf16.msra.mxu0 0
    %197 = vmatprep.subr.bf16.mxu0 0
    %198 = vmatpush2.bf16.msra.mxu0 0
    %199 = vmatprep.subr.bf16.mxu0 0
    %200 = vmatpush2.bf16.msra.mxu0 0
    %201 = vmatprep.subr.bf16.mxu0 0
    %202 = vmatpush2.bf16.msra.mxu0 0
    %203 = vmatprep.mubr.bf16.mxu0 0
    %204 = vmatmul.mubr.bf16.gmra.mxu0 %v79
    %v205 = vpop.f32.mrf.mxu0
    %v206 = vadd.f32 %v84, %v205
    %v207 = vpop.f32.mrf.mxu0
    %v208 = vadd.f32 %v88, %v207
    %v209 = vpop.f32.mrf.mxu0
    %v210 = vpop.f32.mrf.mxu0
    %211 = vdwg.mxu0
    %212 = vst [vmem:[#allocation8] sm:$0xff] %v206
    %213 = vst [vmem:[#allocation8 + $0x8] sm:$0xff] %v208
    %v214 = vld [vmem:[#allocation5] sm:$0xff]
    %v215 = vld [vmem:[#allocation5 + $0x8] sm:$0xff]
    %v216 = vpack.c.bf16 %v215, %v214
    %217 = vmatprep.subr.bf16.mxu0 %v154
    %218 = vmatpush1.bf16.msra.mxu0 %v153
    %219 = vmatprep.subr.bf16.mxu0 %v152
    %220 = vmatpush1.bf16.msra.mxu0 %v151
    %221 = vmatprep.subr.bf16.mxu0 %v150
    %222 = vmatpush1.bf16.msra.mxu0 %v149
    %223 = vmatprep.subr.bf16.mxu0 %v148
    %224 = vmatpush1.bf16.msra.mxu0 %v147
    %225 = vmatprep.subr.bf16.mxu0 %v146
    %226 = vmatpush1.bf16.msra.mxu0 %v145
    %227 = vmatprep.subr.bf16.mxu0 %v144
    %228 = vmatpush1.bf16.msra.mxu0 %v143
    %229 = vmatprep.subr.bf16.mxu0 %v142
    %230 = vmatpush1.bf16.msra.mxu0 %v141
    %231 = vmatprep.subr.bf16.mxu0 %v140
    %232 = vmatpush1.bf16.msra.mxu0 %v139
    %233 = vmatprep.subr.bf16.mxu0 0
    %234 = vmatpush2.bf16.msra.mxu0 0
    %235 = vmatprep.subr.bf16.mxu0 0
    %236 = vmatpush2.bf16.msra.mxu0 0
    %237 = vmatprep.subr.bf16.mxu0 0
    %238 = vmatpush2.bf16.msra.mxu0 0
    %239 = vmatprep.subr.bf16.mxu0 0
    %240 = vmatpush2.bf16.msra.mxu0 0
    %241 = vmatprep.subr.bf16.mxu0 0
    %242 = vmatpush2.bf16.msra.mxu0 0
    %243 = vmatprep.subr.bf16.mxu0 0
    %244 = vmatpush2.bf16.msra.mxu0 0
    %245 = vmatprep.subr.bf16.mxu0 0
    %246 = vmatpush2.bf16.msra.mxu0 0
    %247 = vmatprep.subr.bf16.mxu0 0
    %248 = vmatpush2.bf16.msra.mxu0 0
    %249 = vmatprep.mubr.bf16.mxu0 0
    %250 = vmatmul.mubr.bf16.gmra.mxu0 %v216
    %v251 = vpop.f32.mrf.mxu0
    %v252 = vadd.f32 %v84, %v251
    %v253 = vpop.f32.mrf.mxu0
    %v254 = vadd.f32 %v88, %v253
    %v255 = vpop.f32.mrf.mxu0
    %v256 = vadd.f32 %v84, %v255
    %v257 = vpop.f32.mrf.mxu0
    %v258 = vadd.f32 %v88, %v257
    %259 = vdwg.mxu0
    %260 = vst [vmem:[#allocation8 + $0x10] sm:$0xff] %v252
    %261 = vst [vmem:[#allocation8 + $0x18] sm:$0xff] %v254
    %262 = vst [vmem:[#allocation8 + $0x20] sm:$0xff] %v256
    %263 = vst [vmem:[#allocation8 + $0x28] sm:$0xff] %v258
    %v264 = vld [vmem:[#allocation5 + $0x8] sm:$0xff]
    %265 = vst [vmem:[#allocation9] sm:$0xff] %v264
    // Predicated region
    $region30: #{_fused_forward.1} parent=1 // pred_check
      _
    $region31: #{_fused_forward.1} parent=1 // pred_check_branch
      %267 = sbr.rel (0) target = $region33
    $region32: #{_fused_forward.1} parent=1 // pred_region
      %s269 = ssub.s32 768, 768
      %270 = vsyncadd [#allocation4], %s269
      %s271 = sshll.u32 [#allocation8], 4
      %s272 = int_to_ptr.vmem [resolvable:$true] %s271
      %277 = dma.vmem_to_hbm [thread:$0]  %s272, 768, %s4, [#allocation4], 256, 256, 16
    $region33: #{_fused_forward.1} parent=1 // pred_fallthru
      _
    // Predicated region
    $region34: #{_fused_forward.1} parent=1 // pred_check
      _
    $region35: #{_fused_forward.1} parent=1 // pred_check_branch
      %279 = sbr.rel (0) target = $region37
    $region36: #{_fused_forward.1} parent=1 // pred_region
      %s281 = ssub.s32 128, 128
      %282 = vsyncadd [#allocation10], %s281
      %s284 = sshll.u32 [#allocation9], 4
      %s285 = int_to_ptr.vmem [resolvable:$true] %s284
      %287 = dma.vmem_to_hbm [thread:$0]  %s285, 128, %s5, [#allocation10]
    $region37: #{_fused_forward.1} parent=1 // pred_fallthru
      _
    // Predicated region
    $region38: #{_fused_forward.1} parent=1 // pred_check
      _
    $region39: #{_fused_forward.1} parent=1 // pred_check_branch
      %289 = sbr.rel (0) target = $region41
    $region40: #{_fused_forward.1} parent=1 // pred_region
      %290 = dma.done [#allocation4], 768
    $region41: #{_fused_forward.1} parent=1 // pred_fallthru
      _
    // Predicated region
    $region42: #{_fused_forward.1} parent=1 // pred_check
      _
    $region43: #{_fused_forward.1} parent=1 // pred_check_branch
      %292 = sbr.rel (0) target = $region45
    $region44: #{_fused_forward.1} parent=1 // pred_region
      %293 = dma.done [#allocation10], 128
    $region45: #{_fused_forward.1} parent=1 // pred_fallthru
      _
    %294 = vsyncpa [#allocation3], 1
    %295 = vsyncpa [#allocation6], 1
    %296 = vsyncpa [#allocation4], 1
    %297 = vsyncpa [#allocation10], 1

</llo_original>
